<compile_context>
chip_gen: v5e
topology: v5e:2x2
jax: 0.10.0
libtpu: 0.0.40
codegen_flags: <defaults>
</compile_context>

<pallas_src>
import functools

import jax
import jax.numpy as jnp
from jax.experimental import pallas as pl
from jax.experimental.pallas import tpu as pltpu

LANE = 128      # lane width (last dim granularity)
SUBLANE = 8     # sublane granularity (second-to-last dim)


def _round_up(x, m):
    return (x + m - 1) // m * m


def _fcnet_fused_kernel(*refs, depth, use_bf16):
    """Whole MLP forward for one batch tile, entirely in VMEM/vregs.

    refs = (x_ref, W_0..W_{d-1}, b_0..b_{d-1}, o_ref); every W/b is the full
    (lane-padded) parameter, resident across all batch tiles.
    """
    x_ref = refs[0]
    w_refs = refs[1:1 + depth]
    b_refs = refs[1 + depth:1 + 2 * depth]
    o_ref = refs[1 + 2 * depth]

    h = x_ref[...].astype(jnp.float32)
    for i in range(depth):
        lhs = h
        w = w_refs[i][...]
        if use_bf16:
            # MXU-friendly inputs; accumulation stays f32.
            lhs = lhs.astype(jnp.bfloat16)
            w = w.astype(jnp.bfloat16)
        h = jnp.dot(lhs, w, preferred_element_type=jnp.float32)
        h = h + b_refs[i][...].astype(jnp.float32)   # (1, N) broadcasts over rows
        if i < depth - 1:
            h = jnp.tanh(h)                          # f32 epilogue (v5e-safe)
    o_ref[...] = h.astype(o_ref.dtype)


def fcnet_forward(x, params, *, tile_b=None, use_bf16=False):
    """Fused FCNet forward. params: list of (W[in,out], b[out])."""
    B, K0 = x.shape
    depth = len(params)

    # Layer widths, lane-padded to multiples of 128.
    dims = [K0] + [w.shape[1] for (w, _) in params]
    pdims = [_round_up(d, LANE) for d in dims]

    # Batch tiling: big pipelined tiles for large B, sublane-aligned for small B.
    if tile_b is None:
        tile_b = min(512, _round_up(B, SUBLANE))
    b_pad = _round_up(B, tile_b)

    # Zero-pad inputs/params. Padded columns stay exactly zero through tanh,
    # and padded rows of the next W are zero, so results are unchanged.
    x_p = jnp.pad(x, ((0, b_pad - B), (0, pdims[0] - K0)))
    ws, bs = [], []
    for i, (w, b) in enumerate(params):
        kin, nout = w.shape
        ws.append(jnp.pad(w, ((0, pdims[i] - kin), (0, pdims[i + 1] - nout))))
        bs.append(jnp.pad(b, (0, pdims[i + 1] - nout)).reshape(1, pdims[i + 1]))

    grid = (b_pad // tile_b,)

    in_specs = [pl.BlockSpec((tile_b, pdims[0]), lambda i: (i, 0))]
    for li in range(depth):
        # Weights/biases: full block, resident across all batch tiles.
        in_specs.append(pl.BlockSpec((pdims[li], pdims[li + 1]), lambda i: (0, 0)))
    for li in range(depth):
        in_specs.append(pl.BlockSpec((1, pdims[li + 1]), lambda i: (0, 0)))
    out_specs = pl.BlockSpec((tile_b, pdims[-1]), lambda i: (i, 0))

    # VMEM budget: double-buffered x/out tiles + (conservatively x2) params
    # + headroom for the intermediate activations held per tile.
    fb = 4  # f32 bytes
    need = 2 * tile_b * pdims[0] * fb + 2 * tile_b * pdims[-1] * fb
    for li in range(depth):
        need += 2 * (pdims[li] * pdims[li + 1] + pdims[li + 1]) * fb
    need += 4 * tile_b * max(pdims) * fb
    # Floor above v5e's 16 MiB scoped default; cap well under v7x's 64 MiB physical.
    vmem_limit = int(min(max(need, 16 * 1024 * 1024), 48 * 1024 * 1024))

    kernel = functools.partial(_fcnet_fused_kernel, depth=depth, use_bf16=use_bf16)

    out_p = pl.pallas_call(
        kernel,
        out_shape=jax.ShapeDtypeStruct((b_pad, pdims[-1]), x.dtype),
        grid_spec=pltpu.PrefetchScalarGridSpec(
            num_scalar_prefetch=0,
            grid=grid,
            in_specs=in_specs,
            out_specs=out_specs,
        ),
        compiler_params=pltpu.CompilerParams(
            dimension_semantics=("parallel",),   # batch tiles independent -> megacore on v7x
            vmem_limit_bytes=vmem_limit,
        ),
    )(x_p, *ws, *bs)

    return out_p[:B, :dims[-1]]


def init_fcnet_params(key, layers):
    """Xavier-normal weights (gain=1), zero biases; W stored as [in, out]."""
    params = []
    for i in range(len(layers) - 1):
        fan_in, fan_out = layers[i], layers[i + 1]
        key, sub = jax.random.split(key)
        std = (2.0 / (fan_in + fan_out)) ** 0.5
        w = std * jax.random.normal(sub, (fan_in, fan_out), dtype=jnp.float32)
        b = jnp.zeros((fan_out,), dtype=jnp.float32)
        params.append((w, b))
    return params


def fcnet_reference(x, params):
    """Pure-JAX reference for correctness check."""
    h = x
    for i, (w, b) in enumerate(params):
        h = h @ w + b
        if i < len(params) - 1:
            h = jnp.tanh(h)
    return h


if __name__ == "__main__":
    key = jax.random.PRNGKey(0)
    layers = [16, 32, 32, 8]   # FCNet(layers=[16,32,32,8]) -> 3 Linear layers
    batch = 8

    key, kx = jax.random.split(key)
    x = jax.random.normal(kx, (batch, layers[0]), dtype=jnp.float32)
    params = init_fcnet_params(key, layers)

    out = fcnet_forward(x, params)
    out = jax.block_until_ready(out)

    ref = fcnet_reference(x, params)
    assert out.shape == (batch, layers[-1])
    assert jnp.allclose(out, ref, atol=1e-5, rtol=1e-5)

    print("KERNEL_OK")
</pallas_src>

<mosaic_0001>
module attributes {stable_mosaic.version = 11 : i64} {
  func.func @_fcnet_fused_kernel(%arg0: i32, %arg1: memref<8x128xf32, #tpu.memory_space<vmem>>, %arg2: memref<128x128xf32, #tpu.memory_space<vmem>>, %arg3: memref<128x128xf32, #tpu.memory_space<vmem>>, %arg4: memref<128x128xf32, #tpu.memory_space<vmem>>, %arg5: memref<1x128xf32, #tpu.memory_space<vmem>>, %arg6: memref<1x128xf32, #tpu.memory_space<vmem>>, %arg7: memref<1x128xf32, #tpu.memory_space<vmem>>, %arg8: memref<8x128xf32, #tpu.memory_space<vmem>>) attributes {dimension_semantics = [#tpu.dimension_semantics<parallel>], iteration_bounds = array<i64: 1>, scalar_prefetch = 0 : i64, scratch_operands = 0 : i64, tpu.core_type = #tpu.core_type<tc>, window_params = [{transform_indices = @transform_0, window_bounds = array<i64: 8, 128>}, {pipeline_mode = #tpu.pipeline_mode<synchronous>, transform_indices = @transform_1, window_bounds = array<i64: 128, 128>}, {pipeline_mode = #tpu.pipeline_mode<synchronous>, transform_indices = @transform_2, window_bounds = array<i64: 128, 128>}, {pipeline_mode = #tpu.pipeline_mode<synchronous>, transform_indices = @transform_3, window_bounds = array<i64: 128, 128>}, {pipeline_mode = #tpu.pipeline_mode<synchronous>, transform_indices = @transform_4, window_bounds = array<i64: 1, 128>}, {pipeline_mode = #tpu.pipeline_mode<synchronous>, transform_indices = @transform_5, window_bounds = array<i64: 1, 128>}, {pipeline_mode = #tpu.pipeline_mode<synchronous>, transform_indices = @transform_6, window_bounds = array<i64: 1, 128>}, {transform_indices = @transform_7, window_bounds = array<i64: 8, 128>}]} {
    %c0 = arith.constant 0 : index
    %c0_0 = arith.constant 0 : index
    %0 = vector.load %arg1[%c0, %c0_0] : memref<8x128xf32, #tpu.memory_space<vmem>>, vector<8x128xf32>
    %c0_1 = arith.constant 0 : index
    %c0_2 = arith.constant 0 : index
    %1 = vector.load %arg2[%c0_1, %c0_2] : memref<128x128xf32, #tpu.memory_space<vmem>>, vector<128x128xf32>
    %cst = arith.constant dense<0.000000e+00> : vector<8x128xf32>
    %2 = tpu.matmul %0, %1, %cst {dimension_numbers = #tpu.dot_dimension_numbers<[1], [0], [0], [1], [0, 0, 1, 1], [], []>} : vector<8x128xf32>, vector<128x128xf32>, vector<8x128xf32> -> vector<8x128xf32>
    %c0_3 = arith.constant 0 : index
    %c0_4 = arith.constant 0 : index
    %3 = vector.load %arg5[%c0_3, %c0_4] : memref<1x128xf32, #tpu.memory_space<vmem>>, vector<1x128xf32>
    %4 = vector.broadcast %3 : vector<1x128xf32> to vector<8x128xf32>
    %5 = arith.addf %2, %4 : vector<8x128xf32>
    %6 = math.tanh %5 : vector<8x128xf32>
    %c0_5 = arith.constant 0 : index
    %c0_6 = arith.constant 0 : index
    %7 = vector.load %arg3[%c0_5, %c0_6] : memref<128x128xf32, #tpu.memory_space<vmem>>, vector<128x128xf32>
    %cst_7 = arith.constant dense<0.000000e+00> : vector<8x128xf32>
    %8 = tpu.matmul %6, %7, %cst_7 {dimension_numbers = #tpu.dot_dimension_numbers<[1], [0], [0], [1], [0, 0, 1, 1], [], []>} : vector<8x128xf32>, vector<128x128xf32>, vector<8x128xf32> -> vector<8x128xf32>
    %c0_8 = arith.constant 0 : index
    %c0_9 = arith.constant 0 : index
    %9 = vector.load %arg6[%c0_8, %c0_9] : memref<1x128xf32, #tpu.memory_space<vmem>>, vector<1x128xf32>
    %10 = vector.broadcast %9 : vector<1x128xf32> to vector<8x128xf32>
    %11 = arith.addf %8, %10 : vector<8x128xf32>
    %12 = math.tanh %11 : vector<8x128xf32>
    %c0_10 = arith.constant 0 : index
    %c0_11 = arith.constant 0 : index
    %13 = vector.load %arg4[%c0_10, %c0_11] : memref<128x128xf32, #tpu.memory_space<vmem>>, vector<128x128xf32>
    %cst_12 = arith.constant dense<0.000000e+00> : vector<8x128xf32>
    %14 = tpu.matmul %12, %13, %cst_12 {dimension_numbers = #tpu.dot_dimension_numbers<[1], [0], [0], [1], [0, 0, 1, 1], [], []>} : vector<8x128xf32>, vector<128x128xf32>, vector<8x128xf32> -> vector<8x128xf32>
    %c0_13 = arith.constant 0 : index
    %c0_14 = arith.constant 0 : index
    %15 = vector.load %arg7[%c0_13, %c0_14] : memref<1x128xf32, #tpu.memory_space<vmem>>, vector<1x128xf32>
    %16 = vector.broadcast %15 : vector<1x128xf32> to vector<8x128xf32>
    %17 = arith.addf %14, %16 : vector<8x128xf32>
    %c0_15 = arith.constant 0 : index
    %c0_16 = arith.constant 0 : index
    %18 = vector.load %arg8[%c0_15, %c0_16] : memref<8x128xf32, #tpu.memory_space<vmem>>, vector<8x128xf32>
    tpu.vector_store %arg8[%c0_15, %c0_16], %17 {strides = array<i32>} : memref<8x128xf32, #tpu.memory_space<vmem>>, vector<8x128xf32>,
    return
  }
  func.func @transform_0(%arg0: i32) -> (i32, i32) {
    %c0_i32 = arith.constant 0 : i32
    %c0_i32_0 = arith.constant 0 : i32
    return %arg0, %c0_i32 : i32, i32
  }
  func.func @transform_1(%arg0: i32) -> (i32, i32) {
    %c0_i32 = arith.constant 0 : i32
    %c0_i32_0 = arith.constant 0 : i32
    %c0_i32_1 = arith.constant 0 : i32
    return %c0_i32, %c0_i32_0 : i32, i32
  }
  func.func @transform_2(%arg0: i32) -> (i32, i32) {
    %c0_i32 = arith.constant 0 : i32
    %c0_i32_0 = arith.constant 0 : i32
    %c0_i32_1 = arith.constant 0 : i32
    return %c0_i32, %c0_i32_0 : i32, i32
  }
  func.func @transform_3(%arg0: i32) -> (i32, i32) {
    %c0_i32 = arith.constant 0 : i32
    %c0_i32_0 = arith.constant 0 : i32
    %c0_i32_1 = arith.constant 0 : i32
    return %c0_i32, %c0_i32_0 : i32, i32
  }
  func.func @transform_4(%arg0: i32) -> (i32, i32) {
    %c0_i32 = arith.constant 0 : i32
    %c0_i32_0 = arith.constant 0 : i32
    %c0_i32_1 = arith.constant 0 : i32
    return %c0_i32, %c0_i32_0 : i32, i32
  }
  func.func @transform_5(%arg0: i32) -> (i32, i32) {
    %c0_i32 = arith.constant 0 : i32
    %c0_i32_0 = arith.constant 0 : i32
    %c0_i32_1 = arith.constant 0 : i32
    return %c0_i32, %c0_i32_0 : i32, i32
  }
  func.func @transform_6(%arg0: i32) -> (i32, i32) {
    %c0_i32 = arith.constant 0 : i32
    %c0_i32_0 = arith.constant 0 : i32
    %c0_i32_1 = arith.constant 0 : i32
    return %c0_i32, %c0_i32_0 : i32, i32
  }
  func.func @transform_7(%arg0: i32) -> (i32, i32) {
    %c0_i32 = arith.constant 0 : i32
    %c0_i32_0 = arith.constant 0 : i32
    return %arg0, %c0_i32 : i32, i32
  }
}

</mosaic_0001>

<llo_original>
// kernel: tpu_custom_call.1
$region0: #{tpu_custom_call.1}
  #allocation0 [shape = 'u32[]', space=smem, size = 0x4, offset = 0x4, fixed_abs, tag = 'smem constant byte address 0x4 - core index']
  #allocation1 [shape = 'u32[72,128]{1,0:T(1,128)}', space=vmem, size = 0x9000, scoped, tag = 'internal scratch']
  %s0 = inlined_call_operand.hbm [shape: f32[8,128], index: 0, kind: input, shape index: {}]
  %s1 = inlined_call_operand.hbm [shape: f32[128,128], index: 1, kind: input, shape index: {}]
  %s2 = inlined_call_operand.hbm [shape: f32[128,128], index: 2, kind: input, shape index: {}]
  %s3 = inlined_call_operand.hbm [shape: f32[128,128], index: 3, kind: input, shape index: {}]
  %s4 = inlined_call_operand.vmem [shape: f32[1,128], index: 4, kind: input, shape index: {}]
  %s5 = inlined_call_operand.vmem [shape: f32[1,128], index: 5, kind: input, shape index: {}]
  %s6 = inlined_call_operand.vmem [shape: f32[1,128], index: 6, kind: input, shape index: {}]
  %s7 = inlined_call_operand.hbm [shape: f32[8,128], index: 7, kind: output, shape index: {}]
  %s8 = sld [smem:[#allocation0]]
  $region54: #{tpu_custom_call.1} parent=0
    _
  %s10 = ssub.s32 1, %s8
  %s11 = scalar_select 0, %s10, %s8
  $region1: #{tpu_custom_call.1} parent=0
    #allocation2 [shape = 'u8[4096]{0}', space=vmem, size = 0x1000, scoped, tag = 'input window, operand 0, single buffered']
    #allocation3 [shape = 's32[1]{0}', space=sflag, size = 0x4, scoped, tag = 'scoped memory for tpu_custom_call.1']
    #allocation4 [shape = 's32[1]{0}', space=sflag, size = 0x4, scoped, tag = 'scoped memory for tpu_custom_call.1']
    #allocation5 [shape = 'u8[65536]{0}', space=vmem, size = 0x10000, scoped, tag = 'input window, operand 1, single buffered']
    #allocation6 [shape = 's32[1]{0}', space=sflag, size = 0x4, scoped, tag = 'scoped memory for tpu_custom_call.1']
    #allocation7 [shape = 'u8[65536]{0}', space=vmem, size = 0x10000, scoped, tag = 'input window, operand 2, single buffered']
    #allocation8 [shape = 'u8[65536]{0}', space=vmem, size = 0x10000, scoped, tag = 'input window, operand 3, single buffered']
    #allocation9 [shape = 's32[1]{0}', space=sflag, size = 0x4, scoped, tag = 'scoped memory for tpu_custom_call.1']
    #allocation10 [shape = 'u8[4096]{0}', space=vmem, size = 0x1000, scoped, tag = 'output window, operand 0, single buffered']
    %12 = vsyncpa [#allocation3], 0
    %13 = vsyncpa [#allocation6], 0
    %14 = vsyncpa [#allocation9], 0
    %15 = vsyncpa [#allocation4], 0
    // Predicated region
    $region2: #{tpu_custom_call.1} parent=1 // pred_check
      _
    $region3: #{tpu_custom_call.1} parent=1 // pred_check_branch
      %17 = sbr.rel (0) target = $region5
    $region4: #{tpu_custom_call.1} parent=1 // pred_region
      %19 = vsyncadd [#allocation3], 0
      %s21 = sshll.u32 %s0, 4
      %s22 = int_to_ptr.hbm [resolvable:$true] %s21
      %s23 = sshll.u32 [#allocation2], 4
      %s24 = int_to_ptr.vmem [resolvable:$true] %s23
      %26 = dma.hbm_to_vmem [thread:$0]  %s22, 128, %s24, [#allocation3]
    $region5: #{tpu_custom_call.1} parent=1 // pred_fallthru
      _
    // Predicated region
    $region6: #{tpu_custom_call.1} parent=1 // pred_check
      _
    $region7: #{tpu_custom_call.1} parent=1 // pred_check_branch
      %28 = sbr.rel (0) target = $region9
    $region8: #{tpu_custom_call.1} parent=1 // pred_region
      %30 = vsyncadd [#allocation6], 0
      %s31 = sshll.u32 %s1, 4
      %s32 = int_to_ptr.hbm [resolvable:$true] %s31
      %s33 = sshll.u32 [#allocation5], 4
      %s34 = int_to_ptr.vmem [resolvable:$true] %s33
      %39 = dma.hbm_to_vmem [thread:$0]  %s32, 2048, %s34, [#allocation6], 128, 128, 8
    $region9: #{tpu_custom_call.1} parent=1 // pred_fallthru
      _
    // Predicated region
    $region10: #{tpu_custom_call.1} parent=1 // pred_check
      _
    $region11: #{tpu_custom_call.1} parent=1 // pred_check_branch
      %41 = sbr.rel (0) target = $region13
    $region12: #{tpu_custom_call.1} parent=1 // pred_region
      %43 = vsyncadd [#allocation6], 0
      %s44 = sshll.u32 %s2, 4
      %s45 = int_to_ptr.hbm [resolvable:$true] %s44
      %s46 = sshll.u32 [#allocation7], 4
      %s47 = int_to_ptr.vmem [resolvable:$true] %s46
      %52 = dma.hbm_to_vmem [thread:$0]  %s45, 2048, %s47, [#allocation6], 128, 128, 8
    $region13: #{tpu_custom_call.1} parent=1 // pred_fallthru
      _
    // Predicated region
    $region14: #{tpu_custom_call.1} parent=1 // pred_check
      _
    $region15: #{tpu_custom_call.1} parent=1 // pred_check_branch
      %54 = sbr.rel (0) target = $region17
    $region16: #{tpu_custom_call.1} parent=1 // pred_region
      %56 = vsyncadd [#allocation9], 0
      %s57 = sshll.u32 %s3, 4
      %s58 = int_to_ptr.hbm [resolvable:$true] %s57
      %s59 = sshll.u32 [#allocation8], 4
      %s60 = int_to_ptr.vmem [resolvable:$true] %s59
      %65 = dma.hbm_to_vmem [thread:$0]  %s58, 2048, %s60, [#allocation9], 128, 128, 8
    $region17: #{tpu_custom_call.1} parent=1 // pred_fallthru
      _
    // Predicated region
    $region18: #{tpu_custom_call.1} parent=1 // pred_check
      _
    $region19: #{tpu_custom_call.1} parent=1 // pred_check_branch
      %67 = sbr.rel (0) target = $region21
    $region20: #{tpu_custom_call.1} parent=1 // pred_region
      _
    $region21: #{tpu_custom_call.1} parent=1 // pred_fallthru
      _
    // Predicated region
    $region22: #{tpu_custom_call.1} parent=1 // pred_check
      _
    $region23: #{tpu_custom_call.1} parent=1 // pred_check_branch
      %69 = sbr.rel (0) target = $region25
    $region24: #{tpu_custom_call.1} parent=1 // pred_region
      _
    $region25: #{tpu_custom_call.1} parent=1 // pred_fallthru
      _
    // Predicated region
    $region26: #{tpu_custom_call.1} parent=1 // pred_check
      _
    $region27: #{tpu_custom_call.1} parent=1 // pred_check_branch
      %71 = sbr.rel (0) target = $region29
    $region28: #{tpu_custom_call.1} parent=1 // pred_region
      _
    $region29: #{tpu_custom_call.1} parent=1 // pred_fallthru
      _
    // Predicated region
    $region30: #{tpu_custom_call.1} parent=1 // pred_check
      _
    $region31: #{tpu_custom_call.1} parent=1 // pred_check_branch
      %73 = sbr.rel (0) target = $region33
    $region32: #{tpu_custom_call.1} parent=1 // pred_region
      %75 = dma.done [#allocation3], 128
    $region33: #{tpu_custom_call.1} parent=1 // pred_fallthru
      _
    // Predicated region
    $region34: #{tpu_custom_call.1} parent=1 // pred_check
      _
    $region35: #{tpu_custom_call.1} parent=1 // pred_check_branch
      %77 = sbr.rel (0) target = $region37
    $region36: #{tpu_custom_call.1} parent=1 // pred_region
      %79 = dma.done [#allocation6], 2048
    $region37: #{tpu_custom_call.1} parent=1 // pred_fallthru
      _
    // Predicated region
    $region38: #{tpu_custom_call.1} parent=1 // pred_check
      _
    $region39: #{tpu_custom_call.1} parent=1 // pred_check_branch
      %81 = sbr.rel (0) target = $region41
    $region40: #{tpu_custom_call.1} parent=1 // pred_region
      %83 = dma.done [#allocation6], 2048
    $region41: #{tpu_custom_call.1} parent=1 // pred_fallthru
      _
    // Predicated region
    $region42: #{tpu_custom_call.1} parent=1 // pred_check
      _
    $region43: #{tpu_custom_call.1} parent=1 // pred_check_branch
      %85 = sbr.rel (0) target = $region45
    $region44: #{tpu_custom_call.1} parent=1 // pred_region
      %87 = dma.done [#allocation9], 2048
    $region45: #{tpu_custom_call.1} parent=1 // pred_fallthru
      _
    %v88 = vld [vmem:[#allocation2] sm:$0xff]
    %v89 = vld [vmem:[#allocation5] sm:$0xff]
    %v90 = vld [vmem:[#allocation5 + $0x8] sm:$0xff]
    %v91 = vld [vmem:[#allocation5 + $0x10] sm:$0xff]
    %v92 = vld [vmem:[#allocation5 + $0x18] sm:$0xff]
    %v93 = vld [vmem:[#allocation5 + $0x20] sm:$0xff]
    %v94 = vld [vmem:[#allocation5 + $0x28] sm:$0xff]
    %v95 = vld [vmem:[#allocation5 + $0x30] sm:$0xff]
    %v96 = vld [vmem:[#allocation5 + $0x38] sm:$0xff]
    %v97 = vld [vmem:[#allocation5 + $0x40] sm:$0xff]
    %v98 = vld [vmem:[#allocation5 + $0x48] sm:$0xff]
    %v99 = vld [vmem:[#allocation5 + $0x50] sm:$0xff]
    %v100 = vld [vmem:[#allocation5 + $0x58] sm:$0xff]
    %v101 = vld [vmem:[#allocation5 + $0x60] sm:$0xff]
    %v102 = vld [vmem:[#allocation5 + $0x68] sm:$0xff]
    %v103 = vld [vmem:[#allocation5 + $0x70] sm:$0xff]
    %v104 = vld [vmem:[#allocation5 + $0x78] sm:$0xff]
    %v105 = vld [vmem:[%s4] sm:$0x1]
    %v107 = vperm.slane %v105, 0
    %109 = vmatpush.msra.mxu0 %v104
    %110 = vmatpush.msra.mxu0 %v103
    %111 = vmatpush.msra.mxu0 %v102
    %112 = vmatpush.msra.mxu0 %v101
    %113 = vmatpush.msra.mxu0 %v100
    %114 = vmatpush.msra.mxu0 %v99
    %115 = vmatpush.msra.mxu0 %v98
    %116 = vmatpush.msra.mxu0 %v97
    %117 = vmatpush.msra.mxu0 %v96
    %118 = vmatpush.msra.mxu0 %v95
    %119 = vmatpush.msra.mxu0 %v94
    %120 = vmatpush.msra.mxu0 %v93
    %121 = vmatpush.msra.mxu0 %v92
    %122 = vmatpush.msra.mxu0 %v91
    %123 = vmatpush.msra.mxu0 %v90
    %124 = vmatpush.msra.mxu0 %v89
    %125 = vmatmul.f32.gmra.mxu0 %v88
    %v126 = vpop.f32.mrf.mxu0
    %v127 = vadd.f32 %v107, %v126
    %128 = vdwg.mxu0
    %v129 = vtanh.pop %v127
    %v130 = vld [vmem:[#allocation7] sm:$0xff]
    %v131 = vld [vmem:[#allocation7 + $0x8] sm:$0xff]
    %v132 = vld [vmem:[#allocation7 + $0x10] sm:$0xff]
    %v133 = vld [vmem:[#allocation7 + $0x18] sm:$0xff]
    %v134 = vld [vmem:[#allocation7 + $0x20] sm:$0xff]
    %v135 = vld [vmem:[#allocation7 + $0x28] sm:$0xff]
    %v136 = vld [vmem:[#allocation7 + $0x30] sm:$0xff]
    %v137 = vld [vmem:[#allocation7 + $0x38] sm:$0xff]
    %v138 = vld [vmem:[#allocation7 + $0x40] sm:$0xff]
    %v139 = vld [vmem:[#allocation7 + $0x48] sm:$0xff]
    %v140 = vld [vmem:[#allocation7 + $0x50] sm:$0xff]
    %v141 = vld [vmem:[#allocation7 + $0x58] sm:$0xff]
    %v142 = vld [vmem:[#allocation7 + $0x60] sm:$0xff]
    %v143 = vld [vmem:[#allocation7 + $0x68] sm:$0xff]
    %v144 = vld [vmem:[#allocation7 + $0x70] sm:$0xff]
    %v145 = vld [vmem:[#allocation7 + $0x78] sm:$0xff]
    %v146 = vld [vmem:[%s5] sm:$0x1]
    %v148 = vperm.slane %v146, 0
    %150 = vmatpush.msra.mxu0 %v145
    %151 = vmatpush.msra.mxu0 %v144
    %152 = vmatpush.msra.mxu0 %v143
    %153 = vmatpush.msra.mxu0 %v142
    %154 = vmatpush.msra.mxu0 %v141
    %155 = vmatpush.msra.mxu0 %v140
    %156 = vmatpush.msra.mxu0 %v139
    %157 = vmatpush.msra.mxu0 %v138
    %158 = vmatpush.msra.mxu0 %v137
    %159 = vmatpush.msra.mxu0 %v136
    %160 = vmatpush.msra.mxu0 %v135
    %161 = vmatpush.msra.mxu0 %v134
    %162 = vmatpush.msra.mxu0 %v133
    %163 = vmatpush.msra.mxu0 %v132
    %164 = vmatpush.msra.mxu0 %v131
    %165 = vmatpush.msra.mxu0 %v130
    %166 = vmatmul.f32.gmra.mxu0 %v129
    %v167 = vpop.f32.mrf.mxu0
    %v168 = vadd.f32 %v148, %v167
    %169 = vdwg.mxu0
    %v170 = vtanh.pop %v168
    %v171 = vld [vmem:[#allocation8] sm:$0xff]
    %v172 = vld [vmem:[#allocation8 + $0x8] sm:$0xff]
    %v173 = vld [vmem:[#allocation8 + $0x10] sm:$0xff]
    %v174 = vld [vmem:[#allocation8 + $0x18] sm:$0xff]
    %v175 = vld [vmem:[#allocation8 + $0x20] sm:$0xff]
    %v176 = vld [vmem:[#allocation8 + $0x28] sm:$0xff]
    %v177 = vld [vmem:[#allocation8 + $0x30] sm:$0xff]
    %v178 = vld [vmem:[#allocation8 + $0x38] sm:$0xff]
    %v179 = vld [vmem:[#allocation8 + $0x40] sm:$0xff]
    %v180 = vld [vmem:[#allocation8 + $0x48] sm:$0xff]
    %v181 = vld [vmem:[#allocation8 + $0x50] sm:$0xff]
    %v182 = vld [vmem:[#allocation8 + $0x58] sm:$0xff]
    %v183 = vld [vmem:[#allocation8 + $0x60] sm:$0xff]
    %v184 = vld [vmem:[#allocation8 + $0x68] sm:$0xff]
    %v185 = vld [vmem:[#allocation8 + $0x70] sm:$0xff]
    %v186 = vld [vmem:[#allocation8 + $0x78] sm:$0xff]
    %v187 = vld [vmem:[%s6] sm:$0x1]
    %v189 = vperm.slane %v187, 0
    %191 = vmatpush.msra.mxu0 %v186
    %192 = vmatpush.msra.mxu0 %v185
    %193 = vmatpush.msra.mxu0 %v184
    %194 = vmatpush.msra.mxu0 %v183
    %195 = vmatpush.msra.mxu0 %v182
    %196 = vmatpush.msra.mxu0 %v181
    %197 = vmatpush.msra.mxu0 %v180
    %198 = vmatpush.msra.mxu0 %v179
    %199 = vmatpush.msra.mxu0 %v178
    %200 = vmatpush.msra.mxu0 %v177
    %201 = vmatpush.msra.mxu0 %v176
    %202 = vmatpush.msra.mxu0 %v175
    %203 = vmatpush.msra.mxu0 %v174
    %204 = vmatpush.msra.mxu0 %v173
    %205 = vmatpush.msra.mxu0 %v172
    %206 = vmatpush.msra.mxu0 %v171
    %207 = vmatmul.f32.gmra.mxu0 %v170
    %v208 = vpop.f32.mrf.mxu0
    %v209 = vadd.f32 %v189, %v208
    %210 = vdwg.mxu0
    %211 = vst [vmem:[#allocation10] sm:$0xff] %v209
    // Predicated region
    $region46: #{tpu_custom_call.1} parent=1 // pred_check
      _
    $region47: #{tpu_custom_call.1} parent=1 // pred_check_branch
      %213 = sbr.rel (0) target = $region49
    $region48: #{tpu_custom_call.1} parent=1 // pred_region
      %215 = vsyncadd [#allocation4], 0
      %s217 = sshll.u32 [#allocation10], 4
      %s218 = int_to_ptr.vmem [resolvable:$true] %s217
      %s219 = sshll.u32 %s7, 4
      %s220 = int_to_ptr.hbm [resolvable:$true] %s219
      %222 = dma.vmem_to_hbm [thread:$0]  %s218, 128, %s220, [#allocation4]
    $region49: #{tpu_custom_call.1} parent=1 // pred_fallthru
      _
    // Predicated region
    $region50: #{tpu_custom_call.1} parent=1 // pred_check
      _
    $region51: #{tpu_custom_call.1} parent=1 // pred_check_branch
      %224 = sbr.rel (0) target = $region53
    $region52: #{tpu_custom_call.1} parent=1 // pred_region
      %226 = dma.done [#allocation4], 128
    $region53: #{tpu_custom_call.1} parent=1 // pred_fallthru
      _
    %227 = vsyncpa [#allocation3], 1
    %228 = vsyncpa [#allocation6], 1
    %229 = vsyncpa [#allocation9], 1
    %230 = vsyncpa [#allocation4], 1

</llo_original>
